<compile_context>
chip_gen: v7x
topology: tpu7x:2x2x1
jax: 0.10.0
libtpu: 0.0.40
codegen_flags: <defaults>
</compile_context>

<pallas_src>
import jax
import jax.numpy as jnp
from jax.experimental import pallas as pl
from jax.experimental.pallas import tpu as pltpu


def _round_up(v, m):
    return ((v + m - 1) // m) * m


def _make_concat_pool_kernel(t_hw, tail_valid, needs_mask, hw_total):
    def kernel(x_ref, avg_ref, max_ref, sum_acc, max_acc):
        k = pl.program_id(2)
        num_k = pl.num_programs(2)

        @pl.when(k == 0)
        def _init():
            sum_acc[...] = jnp.zeros_like(sum_acc)
            max_acc[...] = jnp.full_like(max_acc, -jnp.inf)

        x = x_ref[...]  # (tn, tc, t_hw) in the native dtype (no full f32 copy)

        def accumulate(x_for_sum, x_for_max):
            # Sum accumulates in f32 without materializing an f32 copy of the block.
            sum_acc[...] += jnp.sum(x_for_sum, axis=-1, dtype=jnp.float32)
            # Block-local max in native dtype, folded into the f32 running max.
            max_acc[...] = jnp.maximum(
                max_acc[...], jnp.max(x_for_max, axis=-1).astype(jnp.float32)
            )

        if needs_mask:
            # Fast path: every full tile is accumulated with zero masking overhead.
            @pl.when(k != num_k - 1)
            def _full_tile():
                accumulate(x, x)

            # Only the final (partial) tile pays for the mask; it is built from a
            # (1, 1, t_hw) lane-index compare and broadcast, minimizing vreg cost.
            @pl.when(k == num_k - 1)
            def _tail_tile():
                lane = jax.lax.broadcasted_iota(jnp.int32, (1, 1, t_hw), 2)
                valid = lane < tail_valid
                x_s = jnp.where(valid, x, jnp.zeros((), dtype=x.dtype))
                x_m = jnp.where(valid, x, jnp.full((), -jnp.inf, dtype=x.dtype))
                accumulate(x_s, x_m)
        else:
            accumulate(x, x)

        @pl.when(k == num_k - 1)
        def _finalize():
            inv = jnp.float32(1.0 / hw_total)
            avg_ref[...] = (sum_acc[...] * inv).astype(avg_ref.dtype)
            max_ref[...] = max_acc[...].astype(max_ref.dtype)

    return kernel


def _choose_tiles(n, c, hw, itemsize, target_bytes):
    """Pick (tn, tc, t_hw) honoring the (8,128) block rules with padded-byte budgets."""
    sub = max(8, 32 // itemsize)  # sublane packing of the second-to-last dim
    tn = 8 if n % 8 == 0 else n   # tn must be a multiple of 8 or the full N

    def padded_bytes(tc, thw):
        return tn * _round_up(tc, sub) * _round_up(thw, 128) * itemsize

    tc = c
    n_tiles = max(1, n // tn)
    # Tile C (multiples of 128, so the (tn, tc) output block stays lane-legal) when a
    # minimal 128-lane slab would blow the tile budget, or when batch tiling alone
    # cannot feed both v7x TensorCores.
    if c % 128 == 0 and c > 128:
        if padded_bytes(c, 128) > target_bytes or n_tiles < 2:
            by_budget = (target_bytes // (tn * 128 * itemsize)) // 128 * 128
            tc = int(min(c, max(128, by_budget)))
            if n_tiles < 2:
                tc = int(min(tc, max(128, (c // 2) // 128 * 128)))

    # Lanes per block so one (padded) input buffer is ~target_bytes; multiple of 128.
    row_bytes = tn * _round_up(tc, sub) * itemsize
    lanes = max(128, (target_bytes // row_bytes) // 128 * 128)
    t_hw = hw if hw <= lanes else int(lanes)  # full-HW block == single contiguous DMA
    return tn, tc, t_hw


# If even a minimal tile would exceed this (only possible via the tn=N fallback with
# a huge, non-128-divisible C), pad N to a multiple of 8 instead of blowing VMEM.
_TILE_HARD_CAP = 8 * 1024 * 1024


def adaptive_concat_pool2d(x, *, target_tile_bytes=4 * 1024 * 1024):
    """x: (N, C, H, W) float array -> (N, 2*C, 1, 1), matching the PyTorch module."""
    n, c, h, w = x.shape
    hw = h * w
    x_flat = x.reshape(n, c, hw)
    itemsize = jnp.dtype(x.dtype).itemsize
    sub = max(8, 32 // itemsize)

    n_eff = n
    tn, tc, t_hw = _choose_tiles(n_eff, c, hw, itemsize, target_tile_bytes)
    padded_in = tn * _round_up(tc, sub) * _round_up(t_hw, 128) * itemsize

    if padded_in > _TILE_HARD_CAP and (n % 8 != 0) and n > 8:
        # tn=N fallback would be too large: pad N up to a multiple of 8 (zeros),
        # slice the outputs afterwards.  Avoids the compile-time VMEM cliff.
        n_eff = _round_up(n, 8)
        x_flat = jnp.pad(x_flat, ((0, n_eff - n), (0, 0), (0, 0)))
        tn, tc, t_hw = _choose_tiles(n_eff, c, hw, itemsize, target_tile_bytes)
        padded_in = tn * _round_up(tc, sub) * _round_up(t_hw, 128) * itemsize

    n_tiles = n_eff // tn
    c_tiles = c // tc
    hw_tiles = pl.cdiv(hw, t_hw)
    needs_mask = (hw % t_hw) != 0
    tail_valid = hw - (hw_tiles - 1) * t_hw

    kernel = _make_concat_pool_kernel(t_hw, tail_valid, needs_mask, hw)

    # Double-buffered input + tiny outputs/scratch + headroom, clamped to a range that
    # is safe on v5e/v6e (128 MiB physical) and v7x (64 MiB physical).
    vmem_limit = int(
        min(48 * 1024 * 1024, max(32 * 1024 * 1024, 2 * padded_in + 4 * 1024 * 1024))
    )

    cost = pl.CostEstimate(
        flops=2 * n_eff * c * hw,
        transcendentals=0,
        bytes_accessed=n_eff * c * hw * itemsize + 2 * n_eff * c * itemsize,
    )

    avg, mx = pl.pallas_call(
        kernel,
        out_shape=(
            jax.ShapeDtypeStruct((n_eff, c), x.dtype),
            jax.ShapeDtypeStruct((n_eff, c), x.dtype),
        ),
        grid_spec=pltpu.PrefetchScalarGridSpec(
            num_scalar_prefetch=0,
            grid=(n_tiles, c_tiles, hw_tiles),
            in_specs=[pl.BlockSpec((tn, tc, t_hw), lambda i, j, k: (i, j, k))],
            out_specs=[
                pl.BlockSpec((tn, tc), lambda i, j, k: (i, j)),
                pl.BlockSpec((tn, tc), lambda i, j, k: (i, j)),
            ],
            scratch_shapes=[
                pltpu.VMEM((tn, tc), jnp.float32),  # running sum
                pltpu.VMEM((tn, tc), jnp.float32),  # running max
            ],
        ),
        compiler_params=pltpu.CompilerParams(
            dimension_semantics=("parallel", "parallel", "arbitrary"),
            vmem_limit_bytes=vmem_limit,
        ),
        cost_estimate=cost,
    )(x_flat)

    if n_eff != n:
        avg = avg[:n]
        mx = mx[:n]
    out = jnp.concatenate([avg, mx], axis=1)  # tiny (N, 2C) concat: cheap in XLA
    return out.reshape(n, 2 * c, 1, 1)


def _reference(x):
    avg_ref = jnp.mean(x, axis=(2, 3), keepdims=True)
    max_ref = jnp.max(x, axis=(2, 3), keepdims=True)
    return jnp.concatenate([avg_ref, max_ref], axis=1)


if __name__ == "__main__":
    key = jax.random.PRNGKey(0)
    k1, k2, k3, k4, k5 = jax.random.split(key, 5)

    # Main small case consistent with the module's forward: batch=2, channels=4, 16x16.
    x1 = jax.random.normal(k1, (2, 4, 16, 16), dtype=jnp.float32)
    y1 = jax.block_until_ready(adaptive_concat_pool2d(x1))
    assert y1.shape == (2, 8, 1, 1), y1.shape
    assert jnp.allclose(y1, _reference(x1), atol=1e-5, rtol=1e-5)

    # Batch-tiled path (N % 8 == 0) and a non-128-aligned full-HW block (HW = 49).
    x2 = jax.random.normal(k2, (8, 16, 7, 7), dtype=jnp.float32)
    y2 = jax.block_until_ready(adaptive_concat_pool2d(x2))
    assert y2.shape == (8, 32, 1, 1), y2.shape
    assert jnp.allclose(y2, _reference(x2), atol=1e-5, rtol=1e-5)

    # HW-tiled reduction with a masked tail (force tiny 128-lane tiles): HW = 300.
    x3 = jax.random.normal(k3, (2, 4, 15, 20), dtype=jnp.float32)
    y3 = jax.block_until_ready(adaptive_concat_pool2d(x3, target_tile_bytes=1))
    assert y3.shape == (2, 8, 1, 1), y3.shape
    assert jnp.allclose(y3, _reference(x3), atol=1e-5, rtol=1e-5)

    # Channel-tiled path (C % 128 == 0, n_tiles == 1 -> two parallel C tiles).
    x4 = jax.random.normal(k4, (2, 256, 10, 10), dtype=jnp.float32)
    y4 = jax.block_until_ready(adaptive_concat_pool2d(x4))
    assert y4.shape == (2, 512, 1, 1), y4.shape
    assert jnp.allclose(y4, _reference(x4), atol=1e-5, rtol=1e-5)

    # bf16 input: f32 sum accumulation inside the kernel, native-dtype max.
    x5 = jax.random.normal(k5, (2, 4, 16, 16), dtype=jnp.bfloat16)
    y5 = jax.block_until_ready(adaptive_concat_pool2d(x5))
    assert y5.shape == (2, 8, 1, 1), y5.shape
    ref5 = _reference(x5.astype(jnp.float32))
    assert jnp.allclose(y5.astype(jnp.float32), ref5, atol=2e-2)

    print("KERNEL_OK")
</pallas_src>

<mosaic_0001>
module attributes {stable_mosaic.version = 11 : i64} {
  func.func @kernel(%arg0: i32, %arg1: i32, %arg2: i32, %arg3: memref<2x4x256xf32, #tpu.memory_space<vmem>>, %arg4: memref<2x4xf32, #tpu.memory_space<vmem>>, %arg5: memref<2x4xf32, #tpu.memory_space<vmem>>, %arg6: memref<2x4xf32, #tpu.memory_space<vmem>>, %arg7: memref<2x4xf32, #tpu.memory_space<vmem>>) attributes {dimension_semantics = [#tpu.dimension_semantics<parallel>, #tpu.dimension_semantics<parallel>, #tpu.dimension_semantics<arbitrary>], iteration_bounds = array<i64: 1, 1, 1>, scalar_prefetch = 0 : i64, scratch_operands = 2 : i64, tpu.core_type = #tpu.core_type<tc>, window_params = [{transform_indices = @transform_0, window_bounds = array<i64: 2, 4, 256>}, {transform_indices = @transform_1, window_bounds = array<i64: 2, 4>}, {transform_indices = @transform_2, window_bounds = array<i64: 2, 4>}]} {
    %c0_i32 = arith.constant 0 : i32
    %0 = arith.cmpi eq, %arg2, %c0_i32 : i32
    %1 = arith.extui %0 : i1 to i32
    %c0_i32_0 = arith.constant 0 : i32
    %2 = arith.cmpi ne, %1, %c0_i32_0 : i32
    scf.if %2 {
      %cst_14 = arith.constant 0.000000e+00 : f32
      %15 = vector.broadcast %cst_14 : f32 to vector<2x4xf32>
      %c0_15 = arith.constant 0 : index
      %c0_16 = arith.constant 0 : index
      %16 = vector.load %arg6[%c0_15, %c0_16] : memref<2x4xf32, #tpu.memory_space<vmem>>, vector<2x4xf32>
      tpu.vector_store %arg6[%c0_15, %c0_16], %15 {strides = array<i32>} : memref<2x4xf32, #tpu.memory_space<vmem>>, vector<2x4xf32>,
      %cst_17 = arith.constant 0xFF800000 : f32
      %17 = vector.broadcast %cst_17 : f32 to vector<2x4xf32>
      %c0_18 = arith.constant 0 : index
      %c0_19 = arith.constant 0 : index
      %18 = vector.load %arg7[%c0_18, %c0_19] : memref<2x4xf32, #tpu.memory_space<vmem>>, vector<2x4xf32>
      tpu.vector_store %arg7[%c0_18, %c0_19], %17 {strides = array<i32>} : memref<2x4xf32, #tpu.memory_space<vmem>>, vector<2x4xf32>,
    } else {
    }
    %c0 = arith.constant 0 : index
    %c0_1 = arith.constant 0 : index
    %c0_2 = arith.constant 0 : index
    %3 = vector.load %arg3[%c0, %c0_1, %c0_2] : memref<2x4x256xf32, #tpu.memory_space<vmem>>, vector<2x4x256xf32>
    %c0_3 = arith.constant 0 : index
    %c0_4 = arith.constant 0 : index
    %4 = vector.load %arg6[%c0_3, %c0_4] : memref<2x4xf32, #tpu.memory_space<vmem>>, vector<2x4xf32>
    %cst = arith.constant dense<0.000000e+00> : vector<2x4xf32>
    %5 = vector.multi_reduction <add>, %3, %cst [2] : vector<2x4x256xf32> to vector<2x4xf32>
    %6 = arith.addf %4, %5 : vector<2x4xf32>
    %c0_5 = arith.constant 0 : index
    %c0_6 = arith.constant 0 : index
    %7 = vector.load %arg6[%c0_5, %c0_6] : memref<2x4xf32, #tpu.memory_space<vmem>>, vector<2x4xf32>
    tpu.vector_store %arg6[%c0_5, %c0_6], %6 {strides = array<i32>} : memref<2x4xf32, #tpu.memory_space<vmem>>, vector<2x4xf32>,
    %c0_7 = arith.constant 0 : index
    %c0_8 = arith.constant 0 : index
    %8 = vector.load %arg7[%c0_7, %c0_8] : memref<2x4xf32, #tpu.memory_space<vmem>>, vector<2x4xf32>
    %cst_9 = arith.constant dense<0xFF800000> : vector<2x4xf32>
    %9 = vector.multi_reduction <maximumf>, %3, %cst_9 [2] : vector<2x4x256xf32> to vector<2x4xf32>
    %10 = arith.maximumf %8, %9 : vector<2x4xf32>
    %c0_10 = arith.constant 0 : index
    %c0_11 = arith.constant 0 : index
    %11 = vector.load %arg7[%c0_10, %c0_11] : memref<2x4xf32, #tpu.memory_space<vmem>>, vector<2x4xf32>
    tpu.vector_store %arg7[%c0_10, %c0_11], %10 {strides = array<i32>} : memref<2x4xf32, #tpu.memory_space<vmem>>, vector<2x4xf32>,
    %c0_i32_12 = arith.constant 0 : i32
    %12 = arith.cmpi eq, %arg2, %c0_i32_12 : i32
    %13 = arith.extui %12 : i1 to i32
    %c0_i32_13 = arith.constant 0 : i32
    %14 = arith.cmpi ne, %13, %c0_i32_13 : i32
    scf.if %14 {
      %c0_14 = arith.constant 0 : index
      %c0_15 = arith.constant 0 : index
      %15 = vector.load %arg6[%c0_14, %c0_15] : memref<2x4xf32, #tpu.memory_space<vmem>>, vector<2x4xf32>
      %cst_16 = arith.constant 3.906250e-03 : f32
      %16 = vector.broadcast %cst_16 : f32 to vector<2x4xf32>
      %17 = arith.mulf %15, %16 : vector<2x4xf32>
      %c0_17 = arith.constant 0 : index
      %c0_18 = arith.constant 0 : index
      %18 = vector.load %arg4[%c0_17, %c0_18] : memref<2x4xf32, #tpu.memory_space<vmem>>, vector<2x4xf32>
      tpu.vector_store %arg4[%c0_17, %c0_18], %17 {strides = array<i32>} : memref<2x4xf32, #tpu.memory_space<vmem>>, vector<2x4xf32>,
      %c0_19 = arith.constant 0 : index
      %c0_20 = arith.constant 0 : index
      %19 = vector.load %arg7[%c0_19, %c0_20] : memref<2x4xf32, #tpu.memory_space<vmem>>, vector<2x4xf32>
      %c0_21 = arith.constant 0 : index
      %c0_22 = arith.constant 0 : index
      %20 = vector.load %arg5[%c0_21, %c0_22] : memref<2x4xf32, #tpu.memory_space<vmem>>, vector<2x4xf32>
      tpu.vector_store %arg5[%c0_21, %c0_22], %19 {strides = array<i32>} : memref<2x4xf32, #tpu.memory_space<vmem>>, vector<2x4xf32>,
    } else {
    }
    return
  }
  func.func @transform_0(%arg0: i32, %arg1: i32, %arg2: i32) -> (i32, i32, i32) {
    %c0_i32 = arith.constant 0 : i32
    return %arg0, %arg1, %arg2 : i32, i32, i32
  }
  func.func @transform_1(%arg0: i32, %arg1: i32, %arg2: i32) -> (i32, i32) {
    %c0_i32 = arith.constant 0 : i32
    return %arg0, %arg1 : i32, i32
  }
  func.func @transform_2(%arg0: i32, %arg1: i32, %arg2: i32) -> (i32, i32) {
    %c0_i32 = arith.constant 0 : i32
    return %arg0, %arg1 : i32, i32
  }
}

</mosaic_0001>

<llo_original>
// kernel: tpu_custom_call.1
$region0: #{tpu_custom_call.1}
  #allocation0 [shape = 'u32[]', space=smem, size = 0x4, offset = 0x4, fixed_abs, tag = 'smem constant byte address 0x4 - core index']
  #allocation1 [shape = 'u32[144,128]{1,0:T(1,128)}', space=vmem, size = 0x12000, scoped, tag = 'internal scratch']
  #allocation2 [shape = 'f32[2,4]{1,0:T(2,128)}', space=vmem, size = 0x400, scoped, tag = 'scratch operand']
  #allocation3 [shape = 'f32[2,4]{1,0:T(2,128)}', space=vmem, size = 0x400, scoped, tag = 'scratch operand']
  %s0 = inlined_call_operand.hbm [shape: f32[2,4,256], index: 0, kind: input, shape index: {}]
  %s1 = inlined_call_operand.hbm [shape: f32[2,4], index: 1, kind: output, shape index: {0}]
  %s2 = inlined_call_operand.hbm [shape: f32[2,4], index: 2, kind: output, shape index: {1}]
  %3 = xla_tuple %s1, %s2
  %s4 = sld [smem:[#allocation0]]
  $region34: #{tpu_custom_call.1} parent=0
    _
  %s6 = ssub.s32 1, %s4
  %s7 = scalar_select 0, %s6, %s4
  $region1: #{tpu_custom_call.1} parent=0
    #allocation4 [shape = 'u8[8192]{0}', space=vmem, size = 0x2000, scoped, tag = 'input window, operand 0, single buffered']
    #allocation5 [shape = 's32[1]{0}', space=sflag, size = 0x4, scoped, tag = 'scoped memory for tpu_custom_call.1']
    #allocation6 [shape = 's32[1]{0}', space=sflag, size = 0x4, scoped, tag = 'scoped memory for tpu_custom_call.1']
    #allocation7 [shape = 'u8[1024]{0}', space=vmem, size = 0x400, scoped, tag = 'output window, operand 0, single buffered']
    #allocation8 [shape = 'u8[1024]{0}', space=vmem, size = 0x400, scoped, tag = 'output window, operand 1, single buffered']
    #allocation9 [shape = 's32[1]{0}', space=sflag, size = 0x4, scoped, tag = 'scoped memory for tpu_custom_call.1']
    %8 = vsyncpa [#allocation5], 0
    %9 = vsyncpa [#allocation6], 0
    %10 = vsyncpa [#allocation9], 0
    // Predicated region
    $region2: #{tpu_custom_call.1} parent=1 // pred_check
      _
    $region3: #{tpu_custom_call.1} parent=1 // pred_check_branch
      %12 = sbr.rel (0) target = $region5
    $region4: #{tpu_custom_call.1} parent=1 // pred_region
      %s14 = ssub.s32 256, 256
      %15 = vsyncadd [#allocation5], %s14
      %s16 = sshll.u32 [#allocation4], 4
      %s17 = int_to_ptr.vmem [resolvable:$true] %s16
      %22 = dma.hbm_to_vmem [thread:$0]  %s0, 256, %s17, [#allocation5], 128, 128, 8
    $region5: #{tpu_custom_call.1} parent=1 // pred_fallthru
      _
    // Predicated region
    $region6: #{tpu_custom_call.1} parent=1 // pred_check
      _
    $region7: #{tpu_custom_call.1} parent=1 // pred_check_branch
      %24 = sbr.rel (0) target = $region9
    $region8: #{tpu_custom_call.1} parent=1 // pred_region
      %25 = dma.done [#allocation5], 256
    $region9: #{tpu_custom_call.1} parent=1 // pred_fallthru
      _
    %p26 = scmp.eq.s32.totalorder 0, 0
    // Predicated region
    $region10: #{tpu_custom_call.1} parent=1 // pred_check
      %p27 = pneg %p26
    $region11: #{tpu_custom_call.1} parent=1 // pred_check_branch
      %29 = sbr.rel (%p27) target = $region13
    $region12: #{tpu_custom_call.1} parent=1 // pred_region
      %vm30 = vcmask 25600
      %31 = vst.msk [vmem:[#allocation2] sm:$0x3] %vm30, 0.0
      %32 = vst.msk [vmem:[#allocation3] sm:$0x3] %vm30, -inf
    $region13: #{tpu_custom_call.1} parent=1 // pred_fallthru
      _
    %v33 = vld [vmem:[#allocation4] sm:$0xff]
    %v34 = vld [vmem:[#allocation4 + $0x8] sm:$0xff]
    %v35 = vld [vmem:[#allocation2] sm:$0x3]
    %v38 = vcombine.high %v33, %v33
    %v39 = vcombine.high %v34, %v34
    %vm42 = vcmask 1043456
    %v43 = vsel %vm42, %v33, 0.0
    %v44 = vsel %vm42, %v38, 0.0
    %v45 = vadd.f32 %v43, %v44
    %46 = vadd.xlane.f32.xlu0 %v45
    %v47 = vpop.xlane.xlu0 %46
    %v48 = vsel %vm42, %v34, 0.0
    %v49 = vsel %vm42, %v39, 0.0
    %v50 = vadd.f32 %v48, %v49
    %51 = vadd.xlane.f32.xlu0 %v50
    %v52 = vpop.xlane.xlu0 %51
    %v55 = vlaneseq
    %v56 = vand.u32 %v55, 127
    %v57 = vlaneseq
    %v58 = vshrl.u32 %v57, 7
    %v59 = vsub.s32 %v56, %v58
    %v60 = vrot.slane %v47, %v59
    %v61 = vlaneseq
    %v62 = vshrl.u32 %v61, 7
    %v63 = vsub.s32 %v56, %v62
    %v64 = vrot.slane %v52, %v63
    %vm65 = vcmask 1041409
    %v66 = vsel %vm65, %v64, %v60
    %v68 = vadd.f32 %v35, %v66
    %vm69 = vcmask 25600
    %70 = vst.msk [vmem:[#allocation2] sm:$0x3] %vm69, %v68
    %v71 = vld [vmem:[#allocation3] sm:$0x3]
    %v72 = vsel %vm42, %v33, -inf
    %v73 = vsel %vm42, %v38, -inf
    %v74 = vmax.f32 %v72, %v73
    %75 = vmax.xlane.f32.xlu0 %v74
    %v76 = vpop.xlane.xlu0 %75
    %v77 = vsel %vm42, %v34, -inf
    %v78 = vsel %vm42, %v39, -inf
    %v79 = vmax.f32 %v77, %v78
    %80 = vmax.xlane.f32.xlu0 %v79
    %v81 = vpop.xlane.xlu0 %80
    %v84 = vlaneseq
    %v85 = vshrl.u32 %v84, 7
    %v86 = vsub.s32 %v56, %v85
    %v87 = vrot.slane %v76, %v86
    %v88 = vlaneseq
    %v89 = vshrl.u32 %v88, 7
    %v90 = vsub.s32 %v56, %v89
    %v91 = vrot.slane %v81, %v90
    %v92 = vsel %vm65, %v91, %v87
    %v94 = vmax.f32 %v71, %v92
    %95 = vst.msk [vmem:[#allocation3] sm:$0x3] %vm69, %v94
    // Predicated region
    $region14: #{tpu_custom_call.1} parent=1 // pred_check
      %p96 = pneg %p26
    $region15: #{tpu_custom_call.1} parent=1 // pred_check_branch
      %98 = sbr.rel (%p96) target = $region17
    $region16: #{tpu_custom_call.1} parent=1 // pred_region
      %v99 = vld [vmem:[#allocation2] sm:$0x3]
      %v100 = vmul.f32 %v99, 0.00390625
      %101 = vst.msk [vmem:[#allocation7] sm:$0x3] %vm69, %v100
      %v102 = vld [vmem:[#allocation3] sm:$0x3]
      %103 = vst.msk [vmem:[#allocation8] sm:$0x3] %vm69, %v102
    $region17: #{tpu_custom_call.1} parent=1 // pred_fallthru
      _
    // Predicated region
    $region18: #{tpu_custom_call.1} parent=1 // pred_check
      _
    $region19: #{tpu_custom_call.1} parent=1 // pred_check_branch
      %105 = sbr.rel (0) target = $region21
    $region20: #{tpu_custom_call.1} parent=1 // pred_region
      %s107 = ssub.s32 32, 32
      %108 = vsyncadd [#allocation6], %s107
      %s110 = sshll.u32 [#allocation7], 4
      %s111 = int_to_ptr.vmem [resolvable:$true] %s110
      %113 = dma.vmem_to_hbm [thread:$0]  %s111, 32, %s1, [#allocation6]
    $region21: #{tpu_custom_call.1} parent=1 // pred_fallthru
      _
    // Predicated region
    $region22: #{tpu_custom_call.1} parent=1 // pred_check
      _
    $region23: #{tpu_custom_call.1} parent=1 // pred_check_branch
      %115 = sbr.rel (0) target = $region25
    $region24: #{tpu_custom_call.1} parent=1 // pred_region
      %s117 = ssub.s32 32, 32
      %118 = vsyncadd [#allocation9], %s117
      %s120 = sshll.u32 [#allocation8], 4
      %s121 = int_to_ptr.vmem [resolvable:$true] %s120
      %123 = dma.vmem_to_hbm [thread:$0]  %s121, 32, %s2, [#allocation9]
    $region25: #{tpu_custom_call.1} parent=1 // pred_fallthru
      _
    // Predicated region
    $region26: #{tpu_custom_call.1} parent=1 // pred_check
      _
    $region27: #{tpu_custom_call.1} parent=1 // pred_check_branch
      %125 = sbr.rel (0) target = $region29
    $region28: #{tpu_custom_call.1} parent=1 // pred_region
      %126 = dma.done [#allocation6], 32
    $region29: #{tpu_custom_call.1} parent=1 // pred_fallthru
      _
    // Predicated region
    $region30: #{tpu_custom_call.1} parent=1 // pred_check
      _
    $region31: #{tpu_custom_call.1} parent=1 // pred_check_branch
      %128 = sbr.rel (0) target = $region33
    $region32: #{tpu_custom_call.1} parent=1 // pred_region
      %129 = dma.done [#allocation9], 32
    $region33: #{tpu_custom_call.1} parent=1 // pred_fallthru
      _
    %130 = vsyncpa [#allocation5], 1
    %131 = vsyncpa [#allocation6], 1
    %132 = vsyncpa [#allocation9], 1

</llo_original>
